<compile_context>
chip_gen: v6e
topology: v6e:2x2x1
jax: 0.10.0
libtpu: 0.0.40
codegen_flags: <defaults>
</compile_context>

<pallas_src>
import functools

import jax
import jax.numpy as jnp
from jax.experimental import pallas as pl
from jax.experimental.pallas import tpu as pltpu


def _hybrid_embed_kernel(p_ref, w1_ref, b1_ref, w2_ref, b2_ref, o_ref):
    # backbone "conv" as a packed matmul: bf16 operands, f32 accumulation (MXU)
    h = jnp.dot(p_ref[...], w1_ref[...], preferred_element_type=jnp.float32)
    h = jnp.maximum(h + b1_ref[...], 0.0)          # bias + ReLU in f32 (VPU)
    # 1x1 projection conv as a packed matmul + bias
    o = jnp.dot(h.astype(w2_ref.dtype), w2_ref[...],
                preferred_element_type=jnp.float32) + b2_ref[...]
    o_ref[...] = o.astype(o_ref.dtype)


def _tpu_caps():
    """(num_tensorcores, vmem_capacity_bytes, mxu_lane_width), conservative fallbacks."""
    vmem_cap = 64 * 1024 * 1024                       # v7x-safe default
    try:
        vmem_cap = int(pltpu.get_tpu_info().vmem_capacity_bytes)
    except Exception:
        pass
    kind = ""
    try:
        kind = jax.devices()[0].device_kind.lower()
    except Exception:
        pass
    num_cores = 2 if "7" in kind else 1               # v7x: 2 TCs/chip; v5e/v6e: 1
    mxu_lanes = 128 if "v5" in kind else 256          # v5e MXU is 128-wide
    return num_cores, vmem_cap, mxu_lanes


def _pick_pack(embed_dim, mxu_lanes):
    """Fold `pack` consecutive (row, E) outputs into one lane-dense row of
    pack*E lanes (a multiple of 128 -> unmasked vst); weights become exact
    block-diagonal kron(I_pack, W)."""
    if embed_dim >= 128:
        return 1
    for p in range(max(1, mxu_lanes // embed_dim), 0, -1):
        if (p * embed_dim) % 128 == 0:
            return p
    return 1


def _pick_row_tile(m_rows, k1p, ep, out_bytes, *, num_cores, vmem_cap, max_tile):
    """Largest multiple-of-16 row tile (bf16 packs [16,128] sublanes) that
    (a) leaves >= num_cores grid steps so every TensorCore gets work,
    (b) keeps double-buffered in/out tiles inside a conservative VMEM budget
        (v7x only has 64 MiB), and (c) amortizes ~0.35us/grid-step overhead."""
    per_row = 2 * (k1p * 2 + ep * out_bytes)          # x2: double-buffered tiles
    budget = max(vmem_cap // 2, 16 * 1024 * 1024)
    budget_rows = max(16, budget // max(per_row, 1))
    t = min(max_tile, budget_rows, pl.cdiv(m_rows, num_cores))
    return max(16, (t // 16) * 16)


def prepare_hybrid_embed_params(w1, b1, w2, b2, *, mxu_lanes=None):
    """One-time weight packing, hoisted OUT of the per-forward jit path:
      * when pack==1, zero-pad the hidden dim to a multiple of 128 so the
        intermediate h stays lane-dense (exact: ReLU(0)=0 against zero w2 rows),
      * block-diagonal kron(I_pack, W) so `pack` patch rows share one lane-dense row,
      * bf16 weight casts (biases stay f32 for the f32 epilogue).
    Returns ((w1_p, b1_p, w2_p, b2_p), pack)."""
    if mxu_lanes is None:
        _, _, mxu_lanes = _tpu_caps()
    K1, F = w1.shape
    E = w2.shape[1]
    pack = _pick_pack(E, mxu_lanes)
    if pack == 1 and F % 128 != 0:
        f_pad = (-F) % 128
        w1 = jnp.pad(w1, ((0, 0), (0, f_pad)))
        b1 = jnp.pad(b1, ((0, f_pad),))
        w2 = jnp.pad(w2, ((0, f_pad), (0, 0)))
        F = F + f_pad
    eye = jnp.eye(pack, dtype=jnp.float32)
    w1_p = jnp.kron(eye, w1).astype(jnp.bfloat16)      # (pack*K1, pack*F) block-diag
    w2_p = jnp.kron(eye, w2).astype(jnp.bfloat16)      # (pack*F,  pack*E) block-diag
    b1_p = jnp.tile(b1, pack).reshape(1, pack * F)     # biases stay f32
    b2_p = jnp.tile(b2, pack).reshape(1, pack * E)
    return (w1_p, b1_p, w2_p, b2_p), pack


@functools.partial(jax.jit, static_argnames=("patch", "pack", "out_dtype"))
def hybrid_embed(x_nchw, w1_p, b1_p, w2_p, b2_p, *, patch=2, pack=1,
                 out_dtype=jnp.bfloat16):
    """x_nchw: (B, C, H, W) float32.  Returns (B, num_patches, embed_dim) out_dtype."""
    B, C, H, W = x_nchw.shape
    hp, wp = H // patch, W // patch
    K1 = patch * patch * C
    K1p, Fp = w1_p.shape
    Ep = w2_p.shape[1]
    E = Ep // pack
    M = B * hp * wp
    out_bytes = jnp.dtype(out_dtype).itemsize

    num_cores, vmem_cap, _ = _tpu_caps()

    # ---- glue: patchify in bf16 (halves the XLA-side HBM round trip).
    # NCHW -> NHWC -> (B, hp, patch, wp, patch, C) -> rows ordered (b, h', w').
    x = jnp.transpose(x_nchw.astype(jnp.bfloat16), (0, 2, 3, 1))
    x = x.reshape(B, hp, patch, wp, patch, C)
    x = jnp.transpose(x, (0, 1, 3, 2, 4, 5))
    patches = x.reshape(M, K1)

    # ---- row tiling; pad rows so any batch/resolution works (pack need not divide M)
    M2 = pl.cdiv(M, pack)
    max_tile = 512 if num_cores > 1 else 1024          # v7x: 64 MiB VMEM, 2 TCs
    tm = _pick_row_tile(M2, K1p, Ep, out_bytes,
                        num_cores=num_cores, vmem_cap=vmem_cap, max_tile=max_tile)
    n_steps = pl.cdiv(M2, tm)
    M2_pad = n_steps * tm
    M_pad = M2_pad * pack
    if M_pad != M:
        patches = jnp.pad(patches, ((0, M_pad - M), (0, 0)))
    patches_p = patches.reshape(M2_pad, K1p)           # free row-major view

    tile_bytes = 2 * tm * (K1p * 2 + Ep * out_bytes)   # double-buffered in/out tiles
    weight_bytes = 2 * ((K1p * Fp + Fp * Ep) * 2 + (Fp + Ep) * 4)
    vmem_limit = int(min(vmem_cap * 3 // 4,
                         max(32 * 1024 * 1024,
                             tile_bytes + weight_bytes + (4 << 20))))

    cost = pl.CostEstimate(
        flops=2 * M2_pad * (K1p * Fp + Fp * Ep),
        transcendentals=0,
        bytes_accessed=(patches_p.size * 2 + w1_p.size * 2 + w2_p.size * 2
                        + b1_p.size * 4 + b2_p.size * 4 + M2_pad * Ep * out_bytes),
    )

    out = pl.pallas_call(
        _hybrid_embed_kernel,
        out_shape=jax.ShapeDtypeStruct((M2_pad, Ep), out_dtype),
        grid_spec=pltpu.PrefetchScalarGridSpec(
            num_scalar_prefetch=0,
            grid=(n_steps,),
            in_specs=[
                pl.BlockSpec((tm, K1p), lambda i: (i, 0)),   # packed patch rows (tiled)
                pl.BlockSpec((K1p, Fp), lambda i: (0, 0)),   # backbone weight (resident)
                pl.BlockSpec((1, Fp), lambda i: (0, 0)),     # backbone bias (f32)
                pl.BlockSpec((Fp, Ep), lambda i: (0, 0)),    # 1x1 proj weight (resident)
                pl.BlockSpec((1, Ep), lambda i: (0, 0)),     # proj bias (f32)
            ],
            out_specs=pl.BlockSpec((tm, Ep), lambda i: (i, 0)),
        ),
        compiler_params=pltpu.CompilerParams(
            dimension_semantics=("parallel",),
            vmem_limit_bytes=vmem_limit,
            # let XLA fold the bf16 patchify producer into the kernel's input read
            allow_input_fusion=[True, False, False, False, False],
        ),
        cost_estimate=cost,
    )(patches_p, w1_p, b1_p, w2_p, b2_p)

    # (M2_pad, pack*E) row-major == (M_pad, E) row-major; drop padded rows.
    # (matches proj(x).flatten(2).transpose(1, 2))
    return out.reshape(M_pad, E)[:M].reshape(B, hp * wp, E)


def _reference(x_nchw, w1, b1, w2, b2, patch=2):
    B, C, H, W = x_nchw.shape
    hp, wp = H // patch, W // patch
    x = jnp.transpose(x_nchw, (0, 2, 3, 1)).reshape(B, hp, patch, wp, patch, C)
    x = jnp.transpose(x, (0, 1, 3, 2, 4, 5)).reshape(B * hp * wp, patch * patch * C)
    h = jnp.maximum(x @ w1 + b1, 0.0)
    o = h @ w2 + b2
    return o.reshape(B, hp * wp, w2.shape[1])


if __name__ == "__main__":
    # Small shapes consistent with the module's forward:
    #   img 16x16, in_chans=4 -> backbone stride-2 conv -> 8x8 feature map,
    #   feature_dim=32, embed_dim=32, num_patches = 64.
    B, C, H, W = 2, 4, 16, 16
    patch = 2
    feature_dim = 32
    embed_dim = 32

    key = jax.random.PRNGKey(0)
    kx, k1, kb1, k2, kb2 = jax.random.split(key, 5)

    x = jax.random.normal(kx, (B, C, H, W), dtype=jnp.float32)
    # deterministic synthetic parameters (conv weights flattened to matmul form)
    w1 = 0.05 * jax.random.normal(k1, (patch * patch * C, feature_dim), jnp.float32)
    b1 = 0.01 * jax.random.normal(kb1, (feature_dim,), jnp.float32)
    w2 = 0.05 * jax.random.normal(k2, (feature_dim, embed_dim), jnp.float32)
    b2 = 0.01 * jax.random.normal(kb2, (embed_dim,), jnp.float32)

    # one-time weight packing, hoisted out of the forward path
    (w1_p, b1_p, w2_p, b2_p), pack = prepare_hybrid_embed_params(w1, b1, w2, b2)

    out = hybrid_embed(x, w1_p, b1_p, w2_p, b2_p, patch=patch, pack=pack,
                       out_dtype=jnp.bfloat16)
    out = jax.block_until_ready(out)

    ref = _reference(x, w1, b1, w2, b2, patch=patch)
    assert out.shape == (B, (H // patch) * (W // patch), embed_dim), out.shape
    # bf16 operands + bf16 output (f32 accumulation) -> loose tolerance vs f32 ref.
    assert jnp.allclose(out.astype(jnp.float32), ref, atol=3e-2, rtol=3e-2), \
        "mismatch vs reference"

    print("KERNEL_OK")
</pallas_src>

<mosaic_0001>
module attributes {stable_mosaic.version = 11 : i64} {
  func.func @_hybrid_embed_kernel(%arg0: i32, %arg1: memref<16x128xbf16, #tpu.memory_space<vmem>>, %arg2: memref<128x256xbf16, #tpu.memory_space<vmem>>, %arg3: memref<1x256xf32, #tpu.memory_space<vmem>>, %arg4: memref<256x256xbf16, #tpu.memory_space<vmem>>, %arg5: memref<1x256xf32, #tpu.memory_space<vmem>>, %arg6: memref<16x256xbf16, #tpu.memory_space<vmem>>) attributes {dimension_semantics = [#tpu.dimension_semantics<parallel>], iteration_bounds = array<i64: 1>, scalar_prefetch = 0 : i64, scratch_operands = 0 : i64, tpu.core_type = #tpu.core_type<tc>, window_params = [{transform_indices = @transform_0, window_bounds = array<i64: 16, 128>}, {pipeline_mode = #tpu.pipeline_mode<synchronous>, transform_indices = @transform_1, window_bounds = array<i64: 128, 256>}, {pipeline_mode = #tpu.pipeline_mode<synchronous>, transform_indices = @transform_2, window_bounds = array<i64: 1, 256>}, {pipeline_mode = #tpu.pipeline_mode<synchronous>, transform_indices = @transform_3, window_bounds = array<i64: 256, 256>}, {pipeline_mode = #tpu.pipeline_mode<synchronous>, transform_indices = @transform_4, window_bounds = array<i64: 1, 256>}, {transform_indices = @transform_5, window_bounds = array<i64: 16, 256>}]} {
    %c0 = arith.constant 0 : index
    %c0_0 = arith.constant 0 : index
    %0 = vector.load %arg1[%c0, %c0_0] : memref<16x128xbf16, #tpu.memory_space<vmem>>, vector<16x128xbf16>
    %c0_1 = arith.constant 0 : index
    %c0_2 = arith.constant 0 : index
    %1 = vector.load %arg2[%c0_1, %c0_2] : memref<128x256xbf16, #tpu.memory_space<vmem>>, vector<128x256xbf16>
    %cst = arith.constant dense<0.000000e+00> : vector<16x256xf32>
    %2 = tpu.matmul %0, %1, %cst {dimension_numbers = #tpu.dot_dimension_numbers<[1], [0], [0], [1], [0, 0, 1, 1], [], []>} : vector<16x128xbf16>, vector<128x256xbf16>, vector<16x256xf32> -> vector<16x256xf32>
    %c0_3 = arith.constant 0 : index
    %c0_4 = arith.constant 0 : index
    %3 = vector.load %arg3[%c0_3, %c0_4] : memref<1x256xf32, #tpu.memory_space<vmem>>, vector<1x256xf32>
    %4 = vector.broadcast %3 : vector<1x256xf32> to vector<16x256xf32>
    %5 = arith.addf %2, %4 : vector<16x256xf32>
    %cst_5 = arith.constant 0.000000e+00 : f32
    %6 = vector.broadcast %cst_5 : f32 to vector<16x256xf32>
    %7 = arith.maximumf %5, %6 : vector<16x256xf32>
    %8 = arith.truncf %7 : vector<16x256xf32> to vector<16x256xbf16>
    %c0_6 = arith.constant 0 : index
    %c0_7 = arith.constant 0 : index
    %9 = vector.load %arg4[%c0_6, %c0_7] : memref<256x256xbf16, #tpu.memory_space<vmem>>, vector<256x256xbf16>
    %cst_8 = arith.constant dense<0.000000e+00> : vector<16x256xf32>
    %10 = tpu.matmul %8, %9, %cst_8 {dimension_numbers = #tpu.dot_dimension_numbers<[1], [0], [0], [1], [0, 0, 1, 1], [], []>} : vector<16x256xbf16>, vector<256x256xbf16>, vector<16x256xf32> -> vector<16x256xf32>
    %c0_9 = arith.constant 0 : index
    %c0_10 = arith.constant 0 : index
    %11 = vector.load %arg5[%c0_9, %c0_10] : memref<1x256xf32, #tpu.memory_space<vmem>>, vector<1x256xf32>
    %12 = vector.broadcast %11 : vector<1x256xf32> to vector<16x256xf32>
    %13 = arith.addf %10, %12 : vector<16x256xf32>
    %14 = arith.truncf %13 : vector<16x256xf32> to vector<16x256xbf16>
    %c0_11 = arith.constant 0 : index
    %c0_12 = arith.constant 0 : index
    %15 = vector.load %arg6[%c0_11, %c0_12] : memref<16x256xbf16, #tpu.memory_space<vmem>>, vector<16x256xbf16>
    tpu.vector_store %arg6[%c0_11, %c0_12], %14 {strides = array<i32>} : memref<16x256xbf16, #tpu.memory_space<vmem>>, vector<16x256xbf16>,
    return
  }
  func.func @transform_0(%arg0: i32) -> (i32, i32) {
    %c0_i32 = arith.constant 0 : i32
    %c0_i32_0 = arith.constant 0 : i32
    return %arg0, %c0_i32 : i32, i32
  }
  func.func @transform_1(%arg0: i32) -> (i32, i32) {
    %c0_i32 = arith.constant 0 : i32
    %c0_i32_0 = arith.constant 0 : i32
    %c0_i32_1 = arith.constant 0 : i32
    return %c0_i32, %c0_i32_0 : i32, i32
  }
  func.func @transform_2(%arg0: i32) -> (i32, i32) {
    %c0_i32 = arith.constant 0 : i32
    %c0_i32_0 = arith.constant 0 : i32
    %c0_i32_1 = arith.constant 0 : i32
    return %c0_i32, %c0_i32_0 : i32, i32
  }
  func.func @transform_3(%arg0: i32) -> (i32, i32) {
    %c0_i32 = arith.constant 0 : i32
    %c0_i32_0 = arith.constant 0 : i32
    %c0_i32_1 = arith.constant 0 : i32
    return %c0_i32, %c0_i32_0 : i32, i32
  }
  func.func @transform_4(%arg0: i32) -> (i32, i32) {
    %c0_i32 = arith.constant 0 : i32
    %c0_i32_0 = arith.constant 0 : i32
    %c0_i32_1 = arith.constant 0 : i32
    return %c0_i32, %c0_i32_0 : i32, i32
  }
  func.func @transform_5(%arg0: i32) -> (i32, i32) {
    %c0_i32 = arith.constant 0 : i32
    %c0_i32_0 = arith.constant 0 : i32
    return %arg0, %c0_i32 : i32, i32
  }
}

</mosaic_0001>

<llo_original>
// kernel: hybrid_embed.1
$region0: #{hybrid_embed.1}
  #allocation0 [shape = 'u32[]', space=smem, size = 0x4, offset = 0x4, fixed_abs, tag = 'smem constant byte address 0x4 - core index']
  #allocation1 [shape = 'u32[144,128]{1,0:T(1,128)}', space=vmem, size = 0x12000, scoped, tag = 'internal scratch']
  %s0 = inlined_call_operand.vmem [shape: bf16[16,128], index: 0, kind: input, shape index: {}]
  %s1 = inlined_call_operand.vmem [shape: bf16[128,256], index: 1, kind: input, shape index: {}]
  %s2 = inlined_call_operand.vmem [shape: f32[1,256], index: 2, kind: input, shape index: {}]
  %s3 = inlined_call_operand.vmem [shape: bf16[256,256], index: 3, kind: input, shape index: {}]
  %s4 = inlined_call_operand.vmem [shape: f32[1,256], index: 4, kind: input, shape index: {}]
  %s5 = inlined_call_operand.vmem [shape: bf16[16,256], index: 5, kind: output, shape index: {}]
  %s6 = sld [smem:[#allocation0]]
  $region30: #{hybrid_embed.1} parent=0
    _
  %s8 = ssub.s32 1, %s6
  %s9 = scalar_select 0, %s8, %s6
  // Predicated region
  $region2: #{hybrid_embed.1} parent=0 // pred_check
    _
  $region3: #{hybrid_embed.1} parent=0 // pred_check_branch
    %11 = sbr.rel (0) target = $region5
  $region4: #{hybrid_embed.1} parent=0 // pred_region
    _
  $region5: #{hybrid_embed.1} parent=0 // pred_fallthru
    _
  // Predicated region
  $region6: #{hybrid_embed.1} parent=0 // pred_check
    _
  $region7: #{hybrid_embed.1} parent=0 // pred_check_branch
    %13 = sbr.rel (0) target = $region9
  $region8: #{hybrid_embed.1} parent=0 // pred_region
    _
  $region9: #{hybrid_embed.1} parent=0 // pred_fallthru
    _
  // Predicated region
  $region10: #{hybrid_embed.1} parent=0 // pred_check
    _
  $region11: #{hybrid_embed.1} parent=0 // pred_check_branch
    %15 = sbr.rel (0) target = $region13
  $region12: #{hybrid_embed.1} parent=0 // pred_region
    _
  $region13: #{hybrid_embed.1} parent=0 // pred_fallthru
    _
  // Predicated region
  $region14: #{hybrid_embed.1} parent=0 // pred_check
    _
  $region15: #{hybrid_embed.1} parent=0 // pred_check_branch
    %17 = sbr.rel (0) target = $region17
  $region16: #{hybrid_embed.1} parent=0 // pred_region
    _
  $region17: #{hybrid_embed.1} parent=0 // pred_fallthru
    _
  // Predicated region
  $region18: #{hybrid_embed.1} parent=0 // pred_check
    _
  $region19: #{hybrid_embed.1} parent=0 // pred_check_branch
    %19 = sbr.rel (0) target = $region21
  $region20: #{hybrid_embed.1} parent=0 // pred_region
    _
  $region21: #{hybrid_embed.1} parent=0 // pred_fallthru
    _
  %v21 = vld [vmem:[%s0] sm:$0xf]
  %v22 = vld [vmem:[%s0 + $0x4] sm:$0xf]
  %v23 = vld [vmem:[%s1] sm:$0xff]
  %v24 = vld [vmem:[%s1 + $0x8] sm:$0xff]
  %v25 = vld [vmem:[%s1 + $0x10] sm:$0xff]
  %v26 = vld [vmem:[%s1 + $0x18] sm:$0xff]
  %v27 = vld [vmem:[%s1 + $0x20] sm:$0xff]
  %v28 = vld [vmem:[%s1 + $0x28] sm:$0xff]
  %v29 = vld [vmem:[%s1 + $0x30] sm:$0xff]
  %v30 = vld [vmem:[%s1 + $0x38] sm:$0xff]
  %v31 = vld [vmem:[%s1 + $0x40] sm:$0xff]
  %v32 = vld [vmem:[%s1 + $0x48] sm:$0xff]
  %v33 = vld [vmem:[%s1 + $0x50] sm:$0xff]
  %v34 = vld [vmem:[%s1 + $0x58] sm:$0xff]
  %v35 = vld [vmem:[%s1 + $0x60] sm:$0xff]
  %v36 = vld [vmem:[%s1 + $0x68] sm:$0xff]
  %v37 = vld [vmem:[%s1 + $0x70] sm:$0xff]
  %v38 = vld [vmem:[%s1 + $0x78] sm:$0xff]
  %v39 = vld [vmem:[%s2] sm:$0x3]
  %v41 = vlaneseq
  %v42 = vshrl.u32 %v41, 7
  %v43 = vsub.s32 0, %v42
  %v44 = vrot.slane %v39, %v43
  %v45 = vlaneseq
  %v46 = vshrl.u32 %v45, 7
  %v47 = vsub.s32 1, %v46
  %v48 = vrot.slane %v39, %v47
  %v53 = vunpack.c.l.b16 %v21
  %v54 = vunpack.c.l.b16 %v22
  %v55 = vpack.c.b16 %v54, %v53
  %v73 = vunpack.c.l.b16 %v23
  %v74 = vunpack.c.h.b16 %v23
  %v75 = vunpack.c.l.b16 %v24
  %v76 = vunpack.c.h.b16 %v24
  %v77 = vunpack.c.l.b16 %v25
  %v78 = vunpack.c.h.b16 %v25
  %v79 = vunpack.c.l.b16 %v26
  %v80 = vunpack.c.h.b16 %v26
  %v81 = vunpack.c.l.b16 %v27
  %v82 = vunpack.c.h.b16 %v27
  %v83 = vunpack.c.l.b16 %v28
  %v84 = vunpack.c.h.b16 %v28
  %v85 = vunpack.c.l.b16 %v29
  %v86 = vunpack.c.h.b16 %v29
  %v87 = vunpack.c.l.b16 %v30
  %v88 = vunpack.c.h.b16 %v30
  %v89 = vunpack.c.l.b16 %v31
  %v90 = vunpack.c.h.b16 %v31
  %v91 = vunpack.c.l.b16 %v32
  %v92 = vunpack.c.h.b16 %v32
  %v93 = vunpack.c.l.b16 %v33
  %v94 = vunpack.c.h.b16 %v33
  %v95 = vunpack.c.l.b16 %v34
  %v96 = vunpack.c.h.b16 %v34
  %v97 = vunpack.c.l.b16 %v35
  %v98 = vunpack.c.h.b16 %v35
  %v99 = vunpack.c.l.b16 %v36
  %v100 = vunpack.c.h.b16 %v36
  %v101 = vunpack.c.l.b16 %v37
  %v102 = vunpack.c.h.b16 %v37
  %v103 = vunpack.c.l.b16 %v38
  %v104 = vunpack.c.h.b16 %v38
  %v105 = vpack.c.b16 %v75, %v73
  %v106 = vpack.c.b16 %v76, %v74
  %v107 = vpack.c.b16 %v79, %v77
  %v108 = vpack.c.b16 %v80, %v78
  %v109 = vpack.c.b16 %v83, %v81
  %v110 = vpack.c.b16 %v84, %v82
  %v111 = vpack.c.b16 %v87, %v85
  %v112 = vpack.c.b16 %v88, %v86
  %v113 = vpack.c.b16 %v91, %v89
  %v114 = vpack.c.b16 %v92, %v90
  %v115 = vpack.c.b16 %v95, %v93
  %v116 = vpack.c.b16 %v96, %v94
  %v117 = vpack.c.b16 %v99, %v97
  %v118 = vpack.c.b16 %v100, %v98
  %v119 = vpack.c.b16 %v103, %v101
  %v120 = vpack.c.b16 %v104, %v102
  %137 = vmatprep.subr.bf16.mxu0 %v120
  %138 = vmatpush1.bf16.msra.mxu0 %v119
  %139 = vmatprep.subr.bf16.mxu0 %v118
  %140 = vmatpush1.bf16.msra.mxu0 %v117
  %141 = vmatprep.subr.bf16.mxu0 %v116
  %142 = vmatpush1.bf16.msra.mxu0 %v115
  %143 = vmatprep.subr.bf16.mxu0 %v114
  %144 = vmatpush1.bf16.msra.mxu0 %v113
  %145 = vmatprep.subr.bf16.mxu0 %v112
  %146 = vmatpush1.bf16.msra.mxu0 %v111
  %147 = vmatprep.subr.bf16.mxu0 %v110
  %148 = vmatpush1.bf16.msra.mxu0 %v109
  %149 = vmatprep.subr.bf16.mxu0 %v108
  %150 = vmatpush1.bf16.msra.mxu0 %v107
  %151 = vmatprep.subr.bf16.mxu0 %v106
  %152 = vmatpush1.bf16.msra.mxu0 %v105
  %153 = vmatprep.subr.bf16.mxu0 0
  %154 = vmatpush2.bf16.msra.mxu0 0
  %155 = vmatprep.subr.bf16.mxu0 0
  %156 = vmatpush2.bf16.msra.mxu0 0
  %157 = vmatprep.subr.bf16.mxu0 0
  %158 = vmatpush2.bf16.msra.mxu0 0
  %159 = vmatprep.subr.bf16.mxu0 0
  %160 = vmatpush2.bf16.msra.mxu0 0
  %161 = vmatprep.subr.bf16.mxu0 0
  %162 = vmatpush2.bf16.msra.mxu0 0
  %163 = vmatprep.subr.bf16.mxu0 0
  %164 = vmatpush2.bf16.msra.mxu0 0
  %165 = vmatprep.subr.bf16.mxu0 0
  %166 = vmatpush2.bf16.msra.mxu0 0
  %167 = vmatprep.subr.bf16.mxu0 0
  %168 = vmatpush2.bf16.msra.mxu0 0
  %169 = vmatprep.mubr.bf16.mxu0 0
  %170 = vmatmul.mubr.bf16.gmra.mxu0 %v55
  %v171 = vpop.f32.mrf.mxu0
  %v172 = vadd.f32 %v44, %v171
  %v173 = vpop.f32.mrf.mxu0
  %v174 = vadd.f32 %v48, %v173
  %v175 = vpop.f32.mrf.mxu0
  %v176 = vadd.f32 %v44, %v175
  %v177 = vpop.f32.mrf.mxu0
  %v178 = vadd.f32 %v48, %v177
  %179 = vdwg.mxu0
  %v180 = vmax.f32 %v172, 0.0
  %v181 = vmax.f32 %v174, 0.0
  %v182 = vmax.f32 %v176, 0.0
  %v183 = vmax.f32 %v178, 0.0
  %v184 = vpack.c.bf16 %v182, %v180
  %v185 = vpack.c.bf16 %v183, %v181
  %v186 = vld [vmem:[%s3] sm:$0xff]
  %v187 = vld [vmem:[%s3 + $0x8] sm:$0xff]
  %v188 = vld [vmem:[%s3 + $0x10] sm:$0xff]
  %v189 = vld [vmem:[%s3 + $0x18] sm:$0xff]
  %v190 = vld [vmem:[%s3 + $0x20] sm:$0xff]
  %v191 = vld [vmem:[%s3 + $0x28] sm:$0xff]
  %v192 = vld [vmem:[%s3 + $0x30] sm:$0xff]
  %v193 = vld [vmem:[%s3 + $0x38] sm:$0xff]
  %v194 = vld [vmem:[%s3 + $0x40] sm:$0xff]
  %v195 = vld [vmem:[%s3 + $0x48] sm:$0xff]
  %v196 = vld [vmem:[%s3 + $0x50] sm:$0xff]
  %v197 = vld [vmem:[%s3 + $0x58] sm:$0xff]
  %v198 = vld [vmem:[%s3 + $0x60] sm:$0xff]
  %v199 = vld [vmem:[%s3 + $0x68] sm:$0xff]
  %v200 = vld [vmem:[%s3 + $0x70] sm:$0xff]
  %v201 = vld [vmem:[%s3 + $0x78] sm:$0xff]
  %v202 = vld [vmem:[%s3 + $0x80] sm:$0xff]
  %v203 = vld [vmem:[%s3 + $0x88] sm:$0xff]
  %v204 = vld [vmem:[%s3 + $0x90] sm:$0xff]
  %v205 = vld [vmem:[%s3 + $0x98] sm:$0xff]
  %v206 = vld [vmem:[%s3 + $0xa0] sm:$0xff]
  %v207 = vld [vmem:[%s3 + $0xa8] sm:$0xff]
  %v208 = vld [vmem:[%s3 + $0xb0] sm:$0xff]
  %v209 = vld [vmem:[%s3 + $0xb8] sm:$0xff]
  %v210 = vld [vmem:[%s3 + $0xc0] sm:$0xff]
  %v211 = vld [vmem:[%s3 + $0xc8] sm:$0xff]
  %v212 = vld [vmem:[%s3 + $0xd0] sm:$0xff]
  %v213 = vld [vmem:[%s3 + $0xd8] sm:$0xff]
  %v214 = vld [vmem:[%s3 + $0xe0] sm:$0xff]
  %v215 = vld [vmem:[%s3 + $0xe8] sm:$0xff]
  %v216 = vld [vmem:[%s3 + $0xf0] sm:$0xff]
  %v217 = vld [vmem:[%s3 + $0xf8] sm:$0xff]
  %v218 = vld [vmem:[%s4] sm:$0x3]
  %v220 = vlaneseq
  %v221 = vshrl.u32 %v220, 7
  %v222 = vsub.s32 0, %v221
  %v223 = vrot.slane %v218, %v222
  %v224 = vlaneseq
  %v225 = vshrl.u32 %v224, 7
  %v226 = vsub.s32 1, %v225
  %v227 = vrot.slane %v218, %v226
  %v262 = vunpack.c.l.b16 %v186
  %v263 = vunpack.c.h.b16 %v186
  %v264 = vunpack.c.l.b16 %v187
  %v265 = vunpack.c.h.b16 %v187
  %v266 = vunpack.c.l.b16 %v188
  %v267 = vunpack.c.h.b16 %v188
  %v268 = vunpack.c.l.b16 %v189
  %v269 = vunpack.c.h.b16 %v189
  %v270 = vunpack.c.l.b16 %v190
  %v271 = vunpack.c.h.b16 %v190
  %v272 = vunpack.c.l.b16 %v191
  %v273 = vunpack.c.h.b16 %v191
  %v274 = vunpack.c.l.b16 %v192
  %v275 = vunpack.c.h.b16 %v192
  %v276 = vunpack.c.l.b16 %v193
  %v277 = vunpack.c.h.b16 %v193
  %v278 = vunpack.c.l.b16 %v194
  %v279 = vunpack.c.h.b16 %v194
  %v280 = vunpack.c.l.b16 %v195
  %v281 = vunpack.c.h.b16 %v195
  %v282 = vunpack.c.l.b16 %v196
  %v283 = vunpack.c.h.b16 %v196
  %v284 = vunpack.c.l.b16 %v197
  %v285 = vunpack.c.h.b16 %v197
  %v286 = vunpack.c.l.b16 %v198
  %v287 = vunpack.c.h.b16 %v198
  %v288 = vunpack.c.l.b16 %v199
  %v289 = vunpack.c.h.b16 %v199
  %v290 = vunpack.c.l.b16 %v200
  %v291 = vunpack.c.h.b16 %v200
  %v292 = vunpack.c.l.b16 %v201
  %v293 = vunpack.c.h.b16 %v201
  %v294 = vunpack.c.l.b16 %v202
  %v295 = vunpack.c.h.b16 %v202
  %v296 = vunpack.c.l.b16 %v203
  %v297 = vunpack.c.h.b16 %v203
  %v298 = vunpack.c.l.b16 %v204
  %v299 = vunpack.c.h.b16 %v204
  %v300 = vunpack.c.l.b16 %v205
  %v301 = vunpack.c.h.b16 %v205
  %v302 = vunpack.c.l.b16 %v206
  %v303 = vunpack.c.h.b16 %v206
  %v304 = vunpack.c.l.b16 %v207
  %v305 = vunpack.c.h.b16 %v207
  %v306 = vunpack.c.l.b16 %v208
  %v307 = vunpack.c.h.b16 %v208
  %v308 = vunpack.c.l.b16 %v209
  %v309 = vunpack.c.h.b16 %v209
  %v310 = vunpack.c.l.b16 %v210
  %v311 = vunpack.c.h.b16 %v210
  %v312 = vunpack.c.l.b16 %v211
  %v313 = vunpack.c.h.b16 %v211
  %v314 = vunpack.c.l.b16 %v212
  %v315 = vunpack.c.h.b16 %v212
  %v316 = vunpack.c.l.b16 %v213
  %v317 = vunpack.c.h.b16 %v213
  %v318 = vunpack.c.l.b16 %v214
  %v319 = vunpack.c.h.b16 %v214
  %v320 = vunpack.c.l.b16 %v215
  %v321 = vunpack.c.h.b16 %v215
  %v322 = vunpack.c.l.b16 %v216
  %v323 = vunpack.c.h.b16 %v216
  %v324 = vunpack.c.l.b16 %v217
  %v325 = vunpack.c.h.b16 %v217
  %v326 = vpack.c.b16 %v264, %v262
  %v327 = vpack.c.b16 %v265, %v263
  %v328 = vpack.c.b16 %v268, %v266
  %v329 = vpack.c.b16 %v269, %v267
  %v330 = vpack.c.b16 %v272, %v270
  %v331 = vpack.c.b16 %v273, %v271
  %v332 = vpack.c.b16 %v276, %v274
  %v333 = vpack.c.b16 %v277, %v275
  %v334 = vpack.c.b16 %v280, %v278
  %v335 = vpack.c.b16 %v281, %v279
  %v336 = vpack.c.b16 %v284, %v282
  %v337 = vpack.c.b16 %v285, %v283
  %v338 = vpack.c.b16 %v288, %v286
  %v339 = vpack.c.b16 %v289, %v287
  %v340 = vpack.c.b16 %v292, %v290
  %v341 = vpack.c.b16 %v293, %v291
  %v342 = vpack.c.b16 %v296, %v294
  %v343 = vpack.c.b16 %v297, %v295
  %v344 = vpack.c.b16 %v300, %v298
  %v345 = vpack.c.b16 %v301, %v299
  %v346 = vpack.c.b16 %v304, %v302
  %v347 = vpack.c.b16 %v305, %v303
  %v348 = vpack.c.b16 %v308, %v306
  %v349 = vpack.c.b16 %v309, %v307
  %v350 = vpack.c.b16 %v312, %v310
  %v351 = vpack.c.b16 %v313, %v311
  %v352 = vpack.c.b16 %v316, %v314
  %v353 = vpack.c.b16 %v317, %v315
  %v354 = vpack.c.b16 %v320, %v318
  %v355 = vpack.c.b16 %v321, %v319
  %v356 = vpack.c.b16 %v324, %v322
  %v357 = vpack.c.b16 %v325, %v323
  %390 = vmatprep.subr.bf16.mxu0 %v341
  %391 = vmatpush1.bf16.msra.mxu0 %v340
  %392 = vmatprep.subr.bf16.mxu0 %v339
  %393 = vmatpush1.bf16.msra.mxu0 %v338
  %394 = vmatprep.subr.bf16.mxu0 %v337
  %395 = vmatpush1.bf16.msra.mxu0 %v336
  %396 = vmatprep.subr.bf16.mxu0 %v335
  %397 = vmatpush1.bf16.msra.mxu0 %v334
  %398 = vmatprep.subr.bf16.mxu0 %v333
  %399 = vmatpush1.bf16.msra.mxu0 %v332
  %400 = vmatprep.subr.bf16.mxu0 %v331
  %401 = vmatpush1.bf16.msra.mxu0 %v330
  %402 = vmatprep.subr.bf16.mxu0 %v329
  %403 = vmatpush1.bf16.msra.mxu0 %v328
  %404 = vmatprep.subr.bf16.mxu0 %v327
  %405 = vmatpush1.bf16.msra.mxu0 %v326
  %406 = vmatprep.subr.bf16.mxu0 %v357
  %407 = vmatpush2.bf16.msra.mxu0 %v356
  %408 = vmatprep.subr.bf16.mxu0 %v355
  %409 = vmatpush2.bf16.msra.mxu0 %v354
  %410 = vmatprep.subr.bf16.mxu0 %v353
  %411 = vmatpush2.bf16.msra.mxu0 %v352
  %412 = vmatprep.subr.bf16.mxu0 %v351
  %413 = vmatpush2.bf16.msra.mxu0 %v350
  %414 = vmatprep.subr.bf16.mxu0 %v349
  %415 = vmatpush2.bf16.msra.mxu0 %v348
  %416 = vmatprep.subr.bf16.mxu0 %v347
  %417 = vmatpush2.bf16.msra.mxu0 %v346
  %418 = vmatprep.subr.bf16.mxu0 %v345
  %419 = vmatpush2.bf16.msra.mxu0 %v344
  %420 = vmatprep.subr.bf16.mxu0 %v343
  %421 = vmatpush2.bf16.msra.mxu0 %v342
  %422 = vmatprep.mubr.bf16.mxu0 %v185
  %423 = vmatmul.mubr.bf16.gmra.mxu0 %v184
  %v424 = vpop.f32.mrf.mxu0
  %v425 = vadd.f32 %v223, %v424
  %v426 = vpop.f32.mrf.mxu0
  %v427 = vadd.f32 %v227, %v426
  %v428 = vpop.f32.mrf.mxu0
  %v429 = vadd.f32 %v223, %v428
  %v430 = vpop.f32.mrf.mxu0
  %v431 = vadd.f32 %v227, %v430
  %432 = vdwg.mxu0
  %v433 = vpack.c.bf16 %v429, %v425
  %v434 = vpack.c.bf16 %v431, %v427
  %v437 = vunpack.c.l.b16 %v433
  %v438 = vunpack.c.l.b16 %v434
  %v439 = vunpack.c.h.b16 %v433
  %v440 = vunpack.c.h.b16 %v434
  %v441 = vpack.c.b16 %v438, %v437
  %v442 = vpack.c.b16 %v440, %v439
  %445 = vst [vmem:[%s5] sm:$0xff] %v441
  %446 = vst [vmem:[%s5 + $0x8] sm:$0xff] %v442
  // Predicated region
  $region22: #{hybrid_embed.1} parent=0 // pred_check
    _
  $region23: #{hybrid_embed.1} parent=0 // pred_check_branch
    %448 = sbr.rel (0) target = $region25
  $region24: #{hybrid_embed.1} parent=0 // pred_region
    _
  $region25: #{hybrid_embed.1} parent=0 // pred_fallthru
    _
  // Predicated region
  $region26: #{hybrid_embed.1} parent=0 // pred_check
    _
  $region27: #{hybrid_embed.1} parent=0 // pred_check_branch
    %450 = sbr.rel (0) target = $region29
  $region28: #{hybrid_embed.1} parent=0 // pred_region
    _
  $region29: #{hybrid_embed.1} parent=0 // pred_fallthru
    _

</llo_original>
